<compile_context>
chip_gen: v7x
topology: tpu7x:2x2x1
jax: 0.10.0
libtpu: 0.0.40
codegen_flags: <defaults>
</compile_context>

<pallas_src>
import functools

import jax
import jax.numpy as jnp
from jax import lax
from jax.experimental import pallas as pl
from jax.experimental.pallas import tpu as pltpu


def _round_up(a, b):
    return (a + b - 1) // b * b


def _pick_tile_n(n, c, tile_n=None):
    """Batch tile: ~2 MiB f32 per (tile_n, C) block, multiple of 8, >=2 tiles."""
    if tile_n is None:
        target_elems = (2 * 1024 * 1024) // 4          # ~2 MiB of f32 per block
        tile_n = max(8, min(2048, target_elems // max(c, 1)))
    tile_n = max(8, _round_up(tile_n, 8))
    if n > 8:
        # keep num_tiles >= 2 so v7x can use both TensorCores on the
        # "parallel" grid axis (no-op on single-TC v5e/v6e).
        tile_n = min(tile_n, _round_up(pl.cdiv(n, 2), 8))
    tile_n = max(8, min(tile_n, _round_up(n, 8)))
    return tile_n


def _la_ce_kernel(*refs, n_rows, tile_n, has_weight):
    if has_weight:
        x_ref, m_ref, tgt_ref, wtgt_ref, out_ref = refs
    else:
        x_ref, m_ref, tgt_ref, out_ref = refs

    pid = pl.program_id(0)

    x = x_ref[...].astype(jnp.float32)        # (tile_n, C)  cast in-kernel
    m = m_ref[...].astype(jnp.float32)        # (1, C)       resident
    tgt = tgt_ref[...]                        # (tile_n, 1)  int32

    # Logit adjustment + numerically stable log-sum-exp (per row).
    x_m = x + m
    x_max = jnp.max(x_m, axis=-1, keepdims=True)
    shifted = x_m - x_max
    lse = jnp.log(jnp.sum(jnp.exp(shifted), axis=-1, keepdims=True))  # (tile_n, 1)

    # One-hot as a bool mask consumed by where (no f32 cast / extra multiplies).
    cls_ids = lax.broadcasted_iota(jnp.int32, x_m.shape, 1)
    onehot = cls_ids == tgt                                           # (tile_n, C) bool
    x_tgt = jnp.sum(jnp.where(onehot, shifted, 0.0), axis=-1, keepdims=True)
    nll_row = lse - x_tgt                                             # -log_softmax[target]

    # Mask rows past the true batch size (ragged last tile, no batch padding).
    row_ids = pid * tile_n + lax.broadcasted_iota(jnp.int32, (tile_n, 1), 0)
    valid = row_ids < n_rows                                          # bool

    if has_weight:
        w_row = wtgt_ref[...]                 # (tile_n, 1) f32, gathered in wrapper
        num = jnp.sum(jnp.where(valid, w_row * nll_row, 0.0))
        den = jnp.sum(jnp.where(valid, w_row, 0.0))
    else:
        num = jnp.sum(jnp.where(valid, nll_row, 0.0))
        den = jnp.sum(valid.astype(jnp.float32))

    # Lane-dense partial output: lane 0 = numerator, lane 1 = denominator.
    lane = lax.broadcasted_iota(jnp.int32, out_ref.shape, 2)
    out_ref[...] = jnp.where(lane == 0, num, jnp.where(lane == 1, den, 0.0))


def logit_adjust_loss(x, target, m_list, weight=None, *, tile_n=None):
    """x: (N, C) logits (any float dtype), target: (N,) int, m_list: (1, C),
    weight: optional (C,) class weights.  Returns scalar f32 loss."""
    n, c = x.shape
    tile_n = _pick_tile_n(n, c, tile_n)
    num_tiles = pl.cdiv(n, tile_n)

    m2 = m_list.reshape(1, c).astype(jnp.float32)
    tgt2 = target.astype(jnp.int32).reshape(n, 1)

    args = [x, m2, tgt2]
    in_specs = [
        pl.BlockSpec((tile_n, c), lambda i: (i, 0)),   # x tile (pipelined, no pad copy)
        pl.BlockSpec((1, c), lambda i: (0, 0)),        # m_list (resident)
        pl.BlockSpec((tile_n, 1), lambda i: (i, 0)),   # target
    ]

    has_weight = weight is not None
    if has_weight:
        # Tiny (N,) gather in plain JAX -> no full-tile onehot*w pass in-kernel.
        w_tgt = weight.astype(jnp.float32)[target].reshape(n, 1)
        args.append(w_tgt)
        in_specs.append(pl.BlockSpec((tile_n, 1), lambda i: (i, 0)))

    kernel = functools.partial(_la_ce_kernel, n_rows=n, tile_n=tile_n,
                               has_weight=has_weight)

    partials = pl.pallas_call(
        kernel,
        out_shape=jax.ShapeDtypeStruct((num_tiles, 8, 128), jnp.float32),
        grid_spec=pltpu.PrefetchScalarGridSpec(
            num_scalar_prefetch=0,
            grid=(num_tiles,),
            in_specs=in_specs,
            out_specs=pl.BlockSpec((1, 8, 128), lambda i: (i, 0, 0)),
        ),
        compiler_params=pltpu.CompilerParams(
            dimension_semantics=("parallel",),          # v7x: shard tiles across TCs
            vmem_limit_bytes=40 * 1024 * 1024),         # v5e's 16 MiB default is too small
    )(*args)

    # Tiny final reduction + weighted-mean divide in plain JAX.
    num = jnp.sum(partials[:, 0, 0])
    den = jnp.sum(partials[:, 0, 1])
    return num / den


def _reference(x, target, m_list, weight=None):
    """Plain-JAX reference of the PyTorch forward."""
    x_m = x.astype(jnp.float32) + m_list.astype(jnp.float32)
    logp = jax.nn.log_softmax(x_m, axis=-1)
    nll = -logp[jnp.arange(x.shape[0]), target]
    if weight is None:
        return jnp.mean(nll)
    w = weight[target]
    return jnp.sum(w * nll) / jnp.sum(w)


if __name__ == "__main__":
    key = jax.random.PRNGKey(0)

    # --- small, deliberately misaligned shapes (exercise ragged-tile masking) ---
    N, C = 10, 37
    cls_num_list = jnp.arange(1, C + 1, dtype=jnp.float32) * 7.0
    tau = 1.0
    cls_p_list = cls_num_list / jnp.sum(cls_num_list)
    m_list = (tau * jnp.log(cls_p_list)).reshape(1, C)

    kx, kt = jax.random.split(key)
    x = jax.random.normal(kx, (N, C), dtype=jnp.float32)
    target = jax.random.randint(kt, (N,), 0, C, dtype=jnp.int32)

    # Unweighted (default) cross-entropy, explicit tiny tile.
    out = jax.block_until_ready(logit_adjust_loss(x, target, m_list, tile_n=8))
    ref = _reference(x, target, m_list)
    assert jnp.allclose(out, ref, rtol=1e-5, atol=1e-5), (out, ref)

    # Class-weighted cross-entropy.
    weight = jax.random.uniform(jax.random.PRNGKey(1), (C,),
                                minval=0.5, maxval=1.5, dtype=jnp.float32)
    out_w = jax.block_until_ready(logit_adjust_loss(x, target, m_list, weight, tile_n=8))
    ref_w = _reference(x, target, m_list, weight)
    assert jnp.allclose(out_w, ref_w, rtol=1e-5, atol=1e-5), (out_w, ref_w)

    # Default (auto) tile path on a slightly larger, still-misaligned shape.
    N2, C2 = 77, 201
    cls_num2 = jnp.arange(1, C2 + 1, dtype=jnp.float32)
    m_list2 = jnp.log(cls_num2 / jnp.sum(cls_num2)).reshape(1, C2)
    k2x, k2t = jax.random.split(jax.random.PRNGKey(2))
    x2 = jax.random.normal(k2x, (N2, C2), dtype=jnp.float32)
    t2 = jax.random.randint(k2t, (N2,), 0, C2, dtype=jnp.int32)
    out2 = jax.block_until_ready(logit_adjust_loss(x2, t2, m_list2))
    ref2 = _reference(x2, t2, m_list2)
    assert jnp.allclose(out2, ref2, rtol=1e-5, atol=1e-5), (out2, ref2)

    print("KERNEL_OK")
</pallas_src>

<mosaic_0001>
module attributes {stable_mosaic.version = 11 : i64} {
  func.func @_la_ce_kernel(%arg0: i32, %arg1: memref<8x37xf32, #tpu.memory_space<vmem>>, %arg2: memref<1x37xf32, #tpu.memory_space<vmem>>, %arg3: memref<8x1xi32, #tpu.memory_space<vmem>>, %arg4: memref<1x8x128xf32, #tpu.memory_space<vmem>>) attributes {dimension_semantics = [#tpu.dimension_semantics<parallel>], iteration_bounds = array<i64: 2>, scalar_prefetch = 0 : i64, scratch_operands = 0 : i64, tpu.core_type = #tpu.core_type<tc>, window_params = [{transform_indices = @transform_0, window_bounds = array<i64: 8, 37>}, {pipeline_mode = #tpu.pipeline_mode<synchronous>, transform_indices = @transform_1, window_bounds = array<i64: 1, 37>}, {transform_indices = @transform_2, window_bounds = array<i64: 8, 1>}, {transform_indices = @transform_3, window_bounds = array<i64: 1, 8, 128>}]} {
    %c0 = arith.constant 0 : index
    %c0_0 = arith.constant 0 : index
    %0 = vector.load %arg1[%c0, %c0_0] : memref<8x37xf32, #tpu.memory_space<vmem>>, vector<8x37xf32>
    %c0_1 = arith.constant 0 : index
    %c0_2 = arith.constant 0 : index
    %1 = vector.load %arg2[%c0_1, %c0_2] : memref<1x37xf32, #tpu.memory_space<vmem>>, vector<1x37xf32>
    %c0_3 = arith.constant 0 : index
    %c0_4 = arith.constant 0 : index
    %2 = vector.load %arg3[%c0_3, %c0_4] : memref<8x1xi32, #tpu.memory_space<vmem>>, vector<8x1xi32>
    %3 = vector.broadcast %1 : vector<1x37xf32> to vector<8x37xf32>
    %4 = arith.addf %0, %3 : vector<8x37xf32>
    %cst = arith.constant dense<0xFF800000> : vector<8xf32>
    %5 = vector.multi_reduction <maximumf>, %4, %cst [1] : vector<8x37xf32> to vector<8xf32>
    %6 = vector.shape_cast %5 : vector<8xf32> to vector<8x1xf32>
    %7 = vector.broadcast %6 : vector<8x1xf32> to vector<8x37xf32>
    %8 = arith.subf %4, %7 : vector<8x37xf32>
    %9 = math.exp %8 : vector<8x37xf32>
    %cst_5 = arith.constant dense<0.000000e+00> : vector<8xf32>
    %10 = vector.multi_reduction <add>, %9, %cst_5 [1] : vector<8x37xf32> to vector<8xf32>
    %11 = vector.shape_cast %10 : vector<8xf32> to vector<8x1xf32>
    %12 = math.log %11 : vector<8x1xf32>
    %13 = tpu.iota {dimensions = array<i32: 1>} : vector<8x37xi32>
    %14 = vector.broadcast %2 : vector<8x1xi32> to vector<8x37xi32>
    %15 = arith.cmpi eq, %13, %14 : vector<8x37xi32>
    %cst_6 = arith.constant 0.000000e+00 : f32
    %16 = vector.broadcast %cst_6 : f32 to vector<8x37xf32>
    %17 = arith.select %15, %8, %16 : vector<8x37xi1>, vector<8x37xf32>
    %cst_7 = arith.constant dense<0.000000e+00> : vector<8xf32>
    %18 = vector.multi_reduction <add>, %17, %cst_7 [1] : vector<8x37xf32> to vector<8xf32>
    %19 = vector.shape_cast %18 : vector<8xf32> to vector<8x1xf32>
    %20 = arith.subf %12, %19 : vector<8x1xf32>
    %c8_i32 = arith.constant 8 : i32
    %21 = arith.muli %arg0, %c8_i32 : i32
    %22 = tpu.iota {dimensions = array<i32: 0>} : vector<8x1xi32>
    %23 = vector.broadcast %21 : i32 to vector<8x1xi32>
    %24 = arith.addi %23, %22 : vector<8x1xi32>
    %c10_i32 = arith.constant 10 : i32
    %25 = vector.broadcast %c10_i32 : i32 to vector<8x1xi32>
    %26 = arith.cmpi slt, %24, %25 : vector<8x1xi32>
    %cst_8 = arith.constant 0.000000e+00 : f32
    %27 = vector.broadcast %cst_8 : f32 to vector<8x1xf32>
    %28 = arith.select %26, %20, %27 : vector<8x1xi1>, vector<8x1xf32>
    %29 = vector.shape_cast %28 : vector<8x1xf32> to vector<1x8x1xf32>
    %cst_9 = arith.constant dense<0.000000e+00> : vector<1xf32>
    %30 = vector.multi_reduction <add>, %29, %cst_9 [1, 2] : vector<1x8x1xf32> to vector<1xf32>
    %31 = vector.shape_cast %30 : vector<1xf32> to vector<1x1x1xf32>
    %32 = vector.extract %31[0, 0, 0] : f32 from vector<1x1x1xf32>
    %33 = arith.extui %26 : vector<8x1xi1> to vector<8x1xi32>
    %34 = arith.sitofp %33 : vector<8x1xi32> to vector<8x1xf32>
    %35 = vector.shape_cast %34 : vector<8x1xf32> to vector<1x8x1xf32>
    %cst_10 = arith.constant dense<0.000000e+00> : vector<1xf32>
    %36 = vector.multi_reduction <add>, %35, %cst_10 [1, 2] : vector<1x8x1xf32> to vector<1xf32>
    %37 = vector.shape_cast %36 : vector<1xf32> to vector<1x1x1xf32>
    %38 = vector.extract %37[0, 0, 0] : f32 from vector<1x1x1xf32>
    %39 = tpu.iota {dimensions = array<i32: 2>} : vector<1x8x128xi32>
    %c0_i32 = arith.constant 0 : i32
    %40 = vector.broadcast %c0_i32 : i32 to vector<1x8x128xi32>
    %41 = arith.cmpi eq, %39, %40 : vector<1x8x128xi32>
    %c1_i32 = arith.constant 1 : i32
    %42 = vector.broadcast %c1_i32 : i32 to vector<1x8x128xi32>
    %43 = arith.cmpi eq, %39, %42 : vector<1x8x128xi32>
    %cst_11 = arith.constant 0.000000e+00 : f32
    %44 = vector.broadcast %38 : f32 to vector<1x8x128xf32>
    %45 = vector.broadcast %cst_11 : f32 to vector<1x8x128xf32>
    %46 = arith.select %43, %44, %45 : vector<1x8x128xi1>, vector<1x8x128xf32>
    %47 = vector.broadcast %32 : f32 to vector<1x8x128xf32>
    %48 = arith.select %41, %47, %46 : vector<1x8x128xi1>, vector<1x8x128xf32>
    %c0_12 = arith.constant 0 : index
    %c0_13 = arith.constant 0 : index
    %c0_14 = arith.constant 0 : index
    %49 = vector.load %arg4[%c0_12, %c0_13, %c0_14] : memref<1x8x128xf32, #tpu.memory_space<vmem>>, vector<1x8x128xf32>
    tpu.vector_store %arg4[%c0_12, %c0_13, %c0_14], %48 {strides = array<i32>} : memref<1x8x128xf32, #tpu.memory_space<vmem>>, vector<1x8x128xf32>,
    return
  }
  func.func @transform_0(%arg0: i32) -> (i32, i32) {
    %c0_i32 = arith.constant 0 : i32
    %c0_i32_0 = arith.constant 0 : i32
    return %arg0, %c0_i32 : i32, i32
  }
  func.func @transform_1(%arg0: i32) -> (i32, i32) {
    %c0_i32 = arith.constant 0 : i32
    %c0_i32_0 = arith.constant 0 : i32
    %c0_i32_1 = arith.constant 0 : i32
    return %c0_i32, %c0_i32_0 : i32, i32
  }
  func.func @transform_2(%arg0: i32) -> (i32, i32) {
    %c0_i32 = arith.constant 0 : i32
    %c0_i32_0 = arith.constant 0 : i32
    return %arg0, %c0_i32 : i32, i32
  }
  func.func @transform_3(%arg0: i32) -> (i32, i32, i32) {
    %c0_i32 = arith.constant 0 : i32
    %c0_i32_0 = arith.constant 0 : i32
    %c0_i32_1 = arith.constant 0 : i32
    return %arg0, %c0_i32, %c0_i32_0 : i32, i32, i32
  }
}

</mosaic_0001>

<llo_original>
// kernel: tpu_custom_call.1
$region0: #{tpu_custom_call.1}
  #allocation0 [shape = 'u32[]', space=smem, size = 0x4, offset = 0x4, fixed_abs, tag = 'smem constant byte address 0x4 - core index']
  #allocation1 [shape = 'u32[144,128]{1,0:T(1,128)}', space=vmem, size = 0x12000, scoped, tag = 'internal scratch']
  %s0 = inlined_call_operand.vmem [shape: f32[10,37], index: 0, kind: input, shape index: {}]
  %s1 = inlined_call_operand.vmem [shape: f32[1,37], index: 1, kind: input, shape index: {}]
  %s2 = inlined_call_operand.vmem [shape: s32[10,1], index: 2, kind: input, shape index: {}]
  %s3 = inlined_call_operand.hbm [shape: f32[2,8,128], index: 3, kind: output, shape index: {}]
  %s4 = sld [smem:[#allocation0]]
  $region45: #{tpu_custom_call.1} parent=0
    _
  %s6 = ssub.s32 1, %s4
  %s7 = scalar_select 0, %s6, %s4
  $region1: #{tpu_custom_call.1} parent=0
    #allocation2 [shape = 'u8[8192]{0}', space=vmem, size = 0x2000, scoped, tag = 'output window, operand 0']
    #allocation3 [shape = 's32[2]{0}', space=sflag, size = 0x8, scoped, tag = 'scoped memory for tpu_custom_call.1']
    %8 = vsyncpa [#allocation3], 0
    %s9 = scalar_lea.sflag [#allocation3], 1
    %10 = vsyncpa %s9, 0
    loop: start=0, step=1, limit=4
    $region2: #{tpu_custom_call.1} parent=1 // loop_pre_header
      _
    $region3: #{tpu_custom_call.1} parent=1 // loop_header
      %s12 = sphi 0, %s16
      %p13 = scmp.ge.s32.totalorder %s12, 4
      %s22 = sphi 0, %s24
      %s25 = sphi 0, %s22
      %s26 = sphi 0, %s25
      %s42 = sphi 0, %s26
      %s46 = sphi 0, %s46
      %s48 = sphi 0, %s46
      %s49 = sphi 0, %s48
      %s63 = sphi 0, %s49
      %s69 = sphi 0, %s71
      %s72 = sphi 0, %s69
      %s73 = sphi 0, %s72
      %s89 = sphi 0, %s73
      %s95 = sphi 0, %s97
      %s98 = sphi 0, %s95
      %s99 = sphi 0, %s98
      %s115 = sphi 0, %s99
    $region4: #{tpu_custom_call.1} parent=1 // loop_header_branch
      %15 = sbr.rel (%p13) target = $region8
    $region5: #{tpu_custom_call.1} parent=1 // loop_body
      %s17 = ssub.s32 %s12, 1
      %s18 = ssub.s32 %s12, 2
      %s19 = sadd.s32 %s12, 1
      %s20 = ssub.s32 %s12, %s19
      %p21 = scmp.eq.s32.totalorder %s20, 0
      %s23 = sadd.s32 %s22, 1
      %s24 = scalar_select %p21, %s22, %s23
      %p27 = pneg %p21
      %p28 = scmp.eq.s32.totalorder %s12, 1
      %p29 = por %p27, %p28
      %p30 = scmp.ne.s32.totalorder %s22, %s25
      %p31 = scmp.eq.s32.totalorder %s12, 0
      %p32 = por %p30, %p31
      %p33 = scmp.ne.s32.totalorder %s22, %s25
      %p34 = scmp.eq.s32.totalorder %s17, 1
      %p35 = por %p33, %p34
      %p36 = scmp.ne.s32.totalorder %s25, %s26
      %p37 = scmp.eq.s32.totalorder %s17, 0
      %p38 = por %p36, %p37
      %p39 = scmp.ne.s32.totalorder %s25, %s26
      %p40 = scmp.eq.s32.totalorder %s18, 1
      %p41 = por %p39, %p40
      %p43 = scmp.ne.s32.totalorder %s26, %s42
      %p44 = scmp.eq.s32.totalorder %s18, 0
      %p45 = por %p43, %p44
      %s47 = sadd.s32 %s46, 1
      %p50 = scmp.eq.s32.totalorder %s12, 1
      %p51 = scmp.ne.s32.totalorder %s46, %s48
      %p52 = scmp.eq.s32.totalorder %s12, 0
      %p53 = por %p51, %p52
      %p54 = scmp.ne.s32.totalorder %s46, %s48
      %p55 = scmp.eq.s32.totalorder %s17, 1
      %p56 = por %p54, %p55
      %p57 = scmp.ne.s32.totalorder %s48, %s49
      %p58 = scmp.eq.s32.totalorder %s17, 0
      %p59 = por %p57, %p58
      %p60 = scmp.ne.s32.totalorder %s48, %s49
      %p61 = scmp.eq.s32.totalorder %s18, 1
      %p62 = por %p60, %p61
      %p64 = scmp.ne.s32.totalorder %s49, %s63
      %p65 = scmp.eq.s32.totalorder %s18, 0
      %p66 = por %p64, %p65
      %s67 = ssub.s32 %s12, %s19
      %p68 = scmp.eq.s32.totalorder %s67, 0
      %s70 = sadd.s32 %s69, 1
      %s71 = scalar_select %p68, %s69, %s70
      %p74 = pneg %p68
      %p75 = scmp.eq.s32.totalorder %s12, 1
      %p76 = por %p74, %p75
      %p77 = scmp.ne.s32.totalorder %s69, %s72
      %p78 = scmp.eq.s32.totalorder %s12, 0
      %p79 = por %p77, %p78
      %p80 = scmp.ne.s32.totalorder %s69, %s72
      %p81 = scmp.eq.s32.totalorder %s17, 1
      %p82 = por %p80, %p81
      %p83 = scmp.ne.s32.totalorder %s72, %s73
      %p84 = scmp.eq.s32.totalorder %s17, 0
      %p85 = por %p83, %p84
      %p86 = scmp.ne.s32.totalorder %s72, %s73
      %p87 = scmp.eq.s32.totalorder %s18, 1
      %p88 = por %p86, %p87
      %p90 = scmp.ne.s32.totalorder %s73, %s89
      %p91 = scmp.eq.s32.totalorder %s18, 0
      %p92 = por %p90, %p91
      %s93 = ssub.s32 %s12, %s19
      %p94 = scmp.eq.s32.totalorder %s93, 0
      %s96 = sadd.s32 %s95, 1
      %s97 = scalar_select %p94, %s95, %s96
      %p100 = pneg %p94
      %p101 = scmp.eq.s32.totalorder %s12, 1
      %p102 = por %p100, %p101
      %p103 = scmp.ne.s32.totalorder %s95, %s98
      %p104 = scmp.eq.s32.totalorder %s12, 0
      %p105 = por %p103, %p104
      %p106 = scmp.ne.s32.totalorder %s95, %s98
      %p107 = scmp.eq.s32.totalorder %s17, 1
      %p108 = por %p106, %p107
      %p109 = scmp.ne.s32.totalorder %s98, %s99
      %p110 = scmp.eq.s32.totalorder %s17, 0
      %p111 = por %p109, %p110
      %p112 = scmp.ne.s32.totalorder %s98, %s99
      %p113 = scmp.eq.s32.totalorder %s18, 1
      %p114 = por %p112, %p113
      %p116 = scmp.ne.s32.totalorder %s99, %s115
      %p117 = scmp.eq.s32.totalorder %s18, 0
      %p118 = por %p116, %p117
      %p119 = scmp.le.s32.totalorder 1, %s12
      %p120 = scmp.lt.s32.totalorder %s12, 3
      %p121 = pnand %p119, %p120
      %p122 = pneg %p121
      // Predicated region
      $region9: #{tpu_custom_call.1} parent=5 // pred_check
        _
      $region10: #{tpu_custom_call.1} parent=5 // pred_check_branch
        %124 = sbr.rel (%p121) target = $region12
      $region11: #{tpu_custom_call.1} parent=5 // pred_region
        %s125 = ssub.s32 %s12, 1
        // Predicated region
        $region13: #{tpu_custom_call.1} parent=11 // pred_check
          %p126 = pneg %p59
        $region14: #{tpu_custom_call.1} parent=11 // pred_check_branch
          %128 = sbr.rel (%p126) target = $region16
        $region15: #{tpu_custom_call.1} parent=11 // pred_region
          _
        $region16: #{tpu_custom_call.1} parent=11 // pred_fallthru
          _
      $region12: #{tpu_custom_call.1} parent=5 // pred_fallthru
        _
      %p129 = scmp.lt.s32.totalorder %s12, 2
      // Predicated region
      $region17: #{tpu_custom_call.1} parent=5 // pred_check
        %p130 = pneg %p129
      $region18: #{tpu_custom_call.1} parent=5 // pred_check_branch
        %132 = sbr.rel (%p130) target = $region20
      $region19: #{tpu_custom_call.1} parent=5 // pred_region
        // Predicated region
        $region21: #{tpu_custom_call.1} parent=19 // pred_check
          %p133 = pneg %p32
        $region22: #{tpu_custom_call.1} parent=19 // pred_check_branch
          %135 = sbr.rel (%p133) target = $region24
        $region23: #{tpu_custom_call.1} parent=19 // pred_region
          %p136 = scmp.lt.s32.totalorder %s12, 1
          %s137 = scalar_select %p136, %s12, 1
          %s138 = smul.addr %s137, 8
          %s139 = scalar_lea.vmem %s0, %s138
        $region24: #{tpu_custom_call.1} parent=19 // pred_fallthru
          _
        // Predicated region
        $region25: #{tpu_custom_call.1} parent=19 // pred_check
          %p140 = pneg %p79
        $region26: #{tpu_custom_call.1} parent=19 // pred_check_branch
          %142 = sbr.rel (%p140) target = $region28
        $region27: #{tpu_custom_call.1} parent=19 // pred_region
          %p143 = scmp.lt.s32.totalorder %s12, 1
          %s144 = scalar_select %p143, %s12, 1
          %s145 = smul.addr %s144, 8
          %s146 = scalar_lea.vmem %s2, %s145
        $region28: #{tpu_custom_call.1} parent=19 // pred_fallthru
          _
      $region20: #{tpu_custom_call.1} parent=5 // pred_fallthru
        _
      %p147 = scmp.le.s32.totalorder 1, %s12
      %p148 = scmp.lt.s32.totalorder %s12, 3
      %p149 = pnand %p147, %p148
      %p150 = pneg %p149
      // Predicated region
      $region29: #{tpu_custom_call.1} parent=5 // pred_check
        _
      $region30: #{tpu_custom_call.1} parent=5 // pred_check_branch
        %152 = sbr.rel (%p149) target = $region32
      $region31: #{tpu_custom_call.1} parent=5 // pred_region
        %s153 = ssub.s32 %s12, 1
        %p154 = scmp.lt.s32.totalorder %s17, 1
        %s155 = scalar_select %p154, %s17, 1
        %s156 = smul.addr %s155, 8
        %s157 = scalar_lea.vmem %s0, %s156
        %p158 = pneg %p38
        %p159 = pneg %p35
        %p160 = pneg %p59
        %p161 = pneg %p56
        %p162 = scmp.lt.s32.totalorder %s17, 1
        %s163 = scalar_select %p162, %s17, 1
        %s164 = smul.addr %s163, 8
        %s165 = scalar_lea.vmem %s2, %s164
        %p166 = pneg %p85
        %p167 = pneg %p82
        %p168 = pneg %p111
        %p169 = pneg %p108
        %s170 = sand.u32 %s98, 1
        %s171 = scalar_lea.sflag [#allocation3], %s170
        %s172 = sand.u32 %s98, 1
        %s173 = smul.addr %s172, 8
        %s174 = scalar_lea.vmem [#allocation2], %s173
        %p175 = scmp.lt.s32.totalorder %s17, 1
        %s176 = scalar_select %p175, %s17, 1
        %s177 = smul.addr %s176, 8
        %s178 = scalar_lea.vmem %s0, %s177
        %p179 = scmp.lt.s32.totalorder %s17, 1
        %s180 = scalar_select %p179, %s17, 1
        %s181 = smul.addr %s180, 8
        %s182 = scalar_lea.vmem %s2, %s181
        %v183 = vld [vmem:[%s178] sm:$0xff]
        %v184 = vld [vmem:[%s1] sm:$0x1]
        %v185 = vld [vmem:[%s182] sm:$0xff]
        %v187 = vlaneseq
        %v188 = vshrl.u32 %v187, 7
        %v189 = vsub.s32 0, %v188
        %v190 = vrot.slane %v184, %v189
        %v192 = vadd.f32 %v183, %v190
        %vm193 = vcmask 302080
        %v194 = vsel %vm193, %v192, -inf
        %195 = vmax.xlane.f32.xlu0 %v194
        %v196 = vpop.xlane.xlu0 %195
        %v197 = vsub.f32 %v192, %v196
        %v198 = vmul.f32 %v197, 1.442695
        %v199 = vpow.pop %v198
        %v200 = vsel %vm193, %v199, 0.0
        %201 = vadd.xlane.f32.xlu0 %v200
        %v202 = vpop.xlane.xlu0 %201
        %v203 = vlog2.pop %v202
        %v204 = vmul.f32 %v203, 0.6931472
        %v205 = vlaneseq
        %v206 = vand.u32 %v205, 127
        %207 = vset.pattern.permute.xlu0 0
        %208 = vperm.xlu0 %207, %v185
        %v209 = vpop.permute.xlu0 %208
        %vm210 = vcmp.eq.s32.totalorder %v206, %v209
        %v211 = vsel %vm210, %v197, 0.0
        %v212 = vsel %vm193, %v211, 0.0
        %213 = vadd.xlane.f32.xlu0 %v212
        %v214 = vpop.xlane.xlu0 %213
        %v215 = vsub.f32 %v204, %v214
        %s216 = smul.u32 %s17, 8
        %v217 = vlaneseq
        %v218 = vshrl.u32 %v217, 7
        %v219 = vstv %s216
        %v220 = vadd.s32 %v219, %v218
        %vm221 = vcmp.lt.s32.totalorder %v220, 10
        %v222 = vsel %vm221, %v215, 0.0
        %vm223 = vcmask 7168
        %v224 = vsel %vm223, %v222, 0.0
        %225 = vadd.xlane.f32.xlu0 %v224
        %v226 = vpop.xlane.xlu0 %225
        %v227 = vrot.slane %v226, 4
        %v228 = vadd.f32 %v226, %v227
        %v229 = vrot.slane %v228, 2
        %v230 = vadd.f32 %v228, %v229
        %v231 = vrot.slane %v230, 1
        %v232 = vadd.f32 %v230, %v231
        %s233 = vtos %v232
        %v234 = vsel %vm221, 1, 0
        %v235 = vcvt.s32.f32 %v234
        %v236 = vsel %vm223, %v235, 0.0
        %237 = vadd.xlane.f32.xlu0 %v236
        %v238 = vpop.xlane.xlu0 %237
        %v239 = vrot.slane %v238, 4
        %v240 = vadd.f32 %v238, %v239
        %v241 = vrot.slane %v240, 2
        %v242 = vadd.f32 %v240, %v241
        %v243 = vrot.slane %v242, 1
        %v244 = vadd.f32 %v242, %v243
        %s245 = vtos %v244
        %vm246 = vcmp.eq.s32.totalorder %v206, 0
        %vm247 = vcmp.eq.s32.totalorder %v206, 1
        %v248 = vstv %s245
        %v249 = vsel %vm247, %v248, 0.0
        %v250 = vstv %s233
        %v251 = vsel %vm246, %v250, %v249
        %252 = vst [vmem:[%s174] sm:$0xff] %v251
        %s253 = sand.u32 %s98, 1
        %s254 = scalar_lea.sflag [#allocation3], %s253
        %s255 = sand.u32 %s98, 1
        %s256 = smul.addr %s255, 8
        %s257 = scalar_lea.vmem [#allocation2], %s256
        // Predicated region
        $region33: #{tpu_custom_call.1} parent=31 // pred_check
          %p258 = pneg %p108
        $region34: #{tpu_custom_call.1} parent=31 // pred_check_branch
          %260 = sbr.rel (%p258) target = $region36
        $region35: #{tpu_custom_call.1} parent=31 // pred_region
          %s262 = ssub.s32 128, 128
          %263 = vsyncadd %s254, %s262
          %s264 = smul.addr %s17, 128
          %s265 = scalar_lea.hbm %s3, %s264
          %s267 = sshll.u32 %s257, 4
          %s268 = int_to_ptr.vmem [resolvable:$true] %s267
          %270 = dma.vmem_to_hbm [thread:$0]  %s268, 128, %s265, %s254
        $region36: #{tpu_custom_call.1} parent=31 // pred_fallthru
          _
      $region32: #{tpu_custom_call.1} parent=5 // pred_fallthru
        _
      %p271 = scmp.le.s32.totalorder 2, %s12
      // Predicated region
      $region37: #{tpu_custom_call.1} parent=5 // pred_check
        %p272 = pneg %p271
      $region38: #{tpu_custom_call.1} parent=5 // pred_check_branch
        %274 = sbr.rel (%p272) target = $region40
      $region39: #{tpu_custom_call.1} parent=5 // pred_region
        %s275 = ssub.s32 %s12, 2
        // Predicated region
        $region41: #{tpu_custom_call.1} parent=39 // pred_check
          %p276 = pneg %p114
        $region42: #{tpu_custom_call.1} parent=39 // pred_check_branch
          %278 = sbr.rel (%p276) target = $region44
        $region43: #{tpu_custom_call.1} parent=39 // pred_region
          %s279 = sand.u32 %s99, 1
          %s280 = scalar_lea.sflag [#allocation3], %s279
          %s281 = sand.u32 %s99, 1
          %s282 = smul.addr %s281, 8
          %s283 = scalar_lea.vmem [#allocation2], %s282
          %284 = dma.done %s280, 128
        $region44: #{tpu_custom_call.1} parent=39 // pred_fallthru
          _
      $region40: #{tpu_custom_call.1} parent=5 // pred_fallthru
        _
    $region6: #{tpu_custom_call.1} parent=1 // loop_footer
      %s16 = sadd.s32 1, %s12
    $region7: #{tpu_custom_call.1} parent=1 // loop_footer_branch
      %11 = sbr.rel target = $region3
    $region8: #{tpu_custom_call.1} parent=1 // loop_exit
      _
    %285 = vsyncpa [#allocation3], 1
    %s286 = scalar_lea.sflag [#allocation3], 1
    %287 = vsyncpa %s286, 1

</llo_original>
